<compile_context>
chip_gen: v7x
topology: tpu7x:2x2x1
jax: 0.10.0
libtpu: 0.0.40
codegen_flags: <defaults>
</compile_context>

<pallas_src>
import math
from functools import partial

import jax
import jax.numpy as jnp
from jax.experimental import pallas as pl
from jax.experimental.pallas import tpu as pltpu

_LANE = 128      # vreg lane width
_SUBLANE = 8     # vreg sublane count (f32)


def _cdiv(a, b):
    return (a + b - 1) // b


def _round_up(x, m):
    return _cdiv(x, m) * m


def _apply_act(y, act):
    if act == "tanh":
        return jnp.tanh(y)       # EUP slot
    if act == "relu":
        return jnp.maximum(y, 0.0)
    return y                     # identity


# ----------------------------------------------------------------------------
# Fused kernel: one batch tile, all layers chained in VMEM / vregs.
# refs = (x_ref, w_0..w_{L-1}, b_0..b_{L-1}, o_ref)
#   x_ref : (TB, D_in)      f32   (streamed per grid step)
#   w_i   : (Din_i, Dout_i) bf16  (VMEM-resident, constant index_map)
#   b_i   : (1, Dout_i)     f32
# ----------------------------------------------------------------------------
def _fused_mlp_kernel(*refs, acts):
    n = len(acts)
    x_ref = refs[0]
    w_refs = refs[1:1 + n]
    b_refs = refs[1 + n:1 + 2 * n]
    o_ref = refs[1 + 2 * n]

    x = x_ref[...]                                      # f32 activations
    for li in range(n):                                 # statically unrolled
        y = jnp.dot(x.astype(jnp.bfloat16),             # bf16 MXU operands
                    w_refs[li][...],                    # bf16 resident weight
                    preferred_element_type=jnp.float32) # f32 accumulate
        y = y + b_refs[li][...]                         # f32 bias broadcast
        x = _apply_act(y, acts[li])                     # f32 activation
    o_ref[...] = x.astype(o_ref.dtype)


def _choose_tile(batch, batch_tile):
    """Batch tile: multiple of 8, balanced so the grid has >=2 steps when
    possible (both v7x TensorCores busy) and tail padding is minimal."""
    batch_tile = max(_SUBLANE, _round_up(batch_tile, _SUBLANE))
    if batch <= _SUBLANE:
        tb = _SUBLANE
    elif batch <= batch_tile:
        tb = _round_up(_cdiv(batch, 2), _SUBLANE)
    else:
        n_tiles = _cdiv(batch, batch_tile)
        tb = _round_up(_cdiv(batch, n_tiles), _SUBLANE)
    b_pad = _round_up(batch, tb)
    return tb, b_pad


def mlp_forward(obs, padded_params, hidden_acts, out_dim, *, batch_tile=512):
    """act_L(...act_1(obs @ W1 + b1)...) computed in one Pallas TPU kernel.

    padded_params: list of (W_pad bf16 (Din_i, Dout_i_pad), b_pad f32 (1, Dout_i_pad)),
                   hidden dims padded to 128-lane multiples (see pad_mlp_params);
                   the first layer keeps the true obs_dim on its input axis.
    """
    B, D_in = obs.shape
    n = len(padded_params)
    assert n == len(hidden_acts)
    assert padded_params[0][0].shape[0] == D_in
    d_out_pad = padded_params[-1][0].shape[1]
    assert out_dim <= d_out_pad

    tb, b_pad = _choose_tile(B, batch_tile)
    grid = (b_pad // tb,)

    x = obs.astype(jnp.float32)
    if b_pad != B:                     # batch-rows only; no feature-dim pad pass
        x = jnp.pad(x, ((0, b_pad - B), (0, 0)))

    # Cost estimate (advisory).
    flops = 2 * b_pad * sum(int(w.shape[0]) * int(w.shape[1])
                            for w, _ in padded_params)
    transcendentals = b_pad * sum(int(w.shape[1])
                                  for (w, _), a in zip(padded_params, hidden_acts)
                                  if a == "tanh")
    w_bytes = sum(int(w.size) * w.dtype.itemsize for w, _ in padded_params)
    bias_bytes = sum(int(b.size) * b.dtype.itemsize for _, b in padded_params)
    bytes_accessed = int(x.size) * 4 + b_pad * d_out_pad * 4 + w_bytes + bias_bytes

    # Explicit scoped-VMEM budget: streamed tiles (x2 buffers) + resident
    # weights/biases + in-kernel intermediates, with headroom, capped at 64 MiB
    # (v7x physical).
    max_d = max([D_in] + [int(w.shape[1]) for w, _ in padded_params])
    need = (2 * tb * D_in * 4
            + 2 * tb * d_out_pad * 4
            + 2 * (w_bytes + bias_bytes)
            + 6 * tb * max_d * 4)
    vmem_limit = int(min(max(2 * need, 32 * 1024 * 1024), 64 * 1024 * 1024))

    def _build_and_call(single_buffer_weights):
        def resident_spec(shape):
            idx = lambda i: (0, 0)
            if single_buffer_weights:
                # Constant index_map -> double buffering is pure VMEM waste.
                return pl.BlockSpec(shape, idx, pipeline_mode=pl.Buffered(1))
            return pl.BlockSpec(shape, idx)

        in_specs = [pl.BlockSpec((tb, D_in), lambda i: (i, 0))]
        ins = [x]
        for w, _ in padded_params:       # weights: VMEM-resident across tiles
            in_specs.append(resident_spec(w.shape))
            ins.append(w)
        for _, b in padded_params:       # biases
            in_specs.append(resident_spec(b.shape))
            ins.append(b)

        return pl.pallas_call(
            partial(_fused_mlp_kernel, acts=tuple(hidden_acts)),
            out_shape=jax.ShapeDtypeStruct((b_pad, d_out_pad), jnp.float32),
            grid=grid,
            in_specs=in_specs,
            out_specs=pl.BlockSpec((tb, d_out_pad), lambda i: (i, 0)),
            compiler_params=pltpu.CompilerParams(
                dimension_semantics=("parallel",),
                vmem_limit_bytes=vmem_limit),
            cost_estimate=pl.CostEstimate(
                flops=flops,
                transcendentals=transcendentals,
                bytes_accessed=bytes_accessed),
        )(*ins)

    try:
        out = _build_and_call(True)
    except Exception:
        # Fallback if this jax build rejects pipeline_mode=pl.Buffered(1).
        out = _build_and_call(False)

    if b_pad == B and d_out_pad == out_dim:
        return out
    return out[:B, :out_dim]


# ----------------------------------------------------------------------------
# Parameter construction mirroring MLP.__init__:
#   Linear(hidden_sizes[i], hidden_sizes[i+1]) with orthogonal(gain=sqrt(2))
#   weights and zero bias, each followed by the chosen activation.
# Weights stored PRE-TRANSPOSED as (in_features, out_features).
# ----------------------------------------------------------------------------
def orthogonal_init(key, out_dim, in_dim, gain):
    # Same scheme as torch.nn.init.orthogonal_: QR of a Gaussian matrix.
    flat = jax.random.normal(key, (max(out_dim, in_dim), min(out_dim, in_dim)),
                             dtype=jnp.float32)
    q, r = jnp.linalg.qr(flat)
    d = jnp.diag(r)
    q = q * jnp.where(d == 0, 1.0, jnp.sign(d))
    if out_dim < in_dim:
        q = q.T
    return gain * q[:out_dim, :in_dim]


def make_mlp_params(key, obs_dim, hidden_sizes, gain=math.sqrt(2.0)):
    sizes = [obs_dim] + list(hidden_sizes)
    params = []
    for i in range(len(hidden_sizes)):
        key, sub = jax.random.split(key)
        w = orthogonal_init(sub, sizes[i + 1], sizes[i], gain)   # (out, in)
        b = jnp.zeros((sizes[i + 1],), dtype=jnp.float32)
        params.append((w.T, b))                                  # store (in, out)
    return params


def pad_mlp_params(params):
    """One-time layer padding (done once at init, not per call):
    hidden dims -> 128-lane multiples, weights cast to bf16 (MXU-native),
    biases kept f32.  The first layer keeps the true obs_dim input axis."""
    padded = []
    for li, (w, b) in enumerate(params):
        d_in, d_out = w.shape
        d_in_p = d_in if li == 0 else _round_up(d_in, _LANE)
        d_out_p = _round_up(d_out, _LANE)
        w_p = jnp.zeros((d_in_p, d_out_p), jnp.bfloat16).at[:d_in, :d_out].set(
            w.astype(jnp.bfloat16))
        b_p = jnp.zeros((1, d_out_p), jnp.float32).at[0, :d_out].set(b)
        padded.append((w_p, b_p))
    return padded


# ----------------------------------------------------------------------------
# Pure-JAX reference (unpadded f32 params, (in,out) weights).
# ----------------------------------------------------------------------------
def mlp_forward_ref(obs, params, hidden_acts):
    x = obs
    for (w, b), act in zip(params, hidden_acts):
        x = _apply_act(x @ w + b, act)
    return x


if __name__ == "__main__":
    key = jax.random.PRNGKey(0)
    k_obs, k_params = jax.random.split(key)

    # MLP("pi", obs_dim=16, hidden_sizes=[32, 32], hidden_acts=nn.Tanh)
    batch = 8
    obs_dim = 16
    hidden_sizes = [32, 32]
    hidden_acts = ["tanh", "tanh"]

    obs = jax.random.normal(k_obs, (batch, obs_dim), dtype=jnp.float32)
    params = make_mlp_params(k_params, obs_dim, hidden_sizes)
    padded_params = pad_mlp_params(params)      # one-time cost, outside forward

    out = mlp_forward(obs, padded_params, hidden_acts, hidden_sizes[-1])
    out = jax.block_until_ready(out)

    ref = mlp_forward_ref(obs, params, hidden_acts)
    assert out.shape == (batch, hidden_sizes[-1])
    # bf16 MXU operands -> loosened tolerance vs. the f32 reference.
    assert jnp.allclose(out, ref, atol=5e-2, rtol=5e-2), "mismatch vs reference"

    print("KERNEL_OK")
</pallas_src>

<mosaic_0001>
module attributes {stable_mosaic.version = 11 : i64} {
  func.func @_fused_mlp_kernel(%arg0: i32, %arg1: memref<8x16xf32, #tpu.memory_space<vmem>>, %arg2: memref<16x128xbf16, #tpu.memory_space<vmem>>, %arg3: memref<128x128xbf16, #tpu.memory_space<vmem>>, %arg4: memref<1x128xf32, #tpu.memory_space<vmem>>, %arg5: memref<1x128xf32, #tpu.memory_space<vmem>>, %arg6: memref<8x128xf32, #tpu.memory_space<vmem>>) attributes {dimension_semantics = [#tpu.dimension_semantics<parallel>], iteration_bounds = array<i64: 1>, scalar_prefetch = 0 : i64, scratch_operands = 0 : i64, tpu.core_type = #tpu.core_type<tc>, window_params = [{transform_indices = @transform_0, window_bounds = array<i64: 8, 16>}, {pipeline_mode = #tpu.pipeline_mode<synchronous>, transform_indices = @transform_1, window_bounds = array<i64: 16, 128>}, {pipeline_mode = #tpu.pipeline_mode<synchronous>, transform_indices = @transform_2, window_bounds = array<i64: 128, 128>}, {pipeline_mode = #tpu.pipeline_mode<synchronous>, transform_indices = @transform_3, window_bounds = array<i64: 1, 128>}, {pipeline_mode = #tpu.pipeline_mode<synchronous>, transform_indices = @transform_4, window_bounds = array<i64: 1, 128>}, {transform_indices = @transform_5, window_bounds = array<i64: 8, 128>}]} {
    %c0 = arith.constant 0 : index
    %c0_0 = arith.constant 0 : index
    %0 = vector.load %arg1[%c0, %c0_0] : memref<8x16xf32, #tpu.memory_space<vmem>>, vector<8x16xf32>
    %1 = arith.truncf %0 : vector<8x16xf32> to vector<8x16xbf16>
    %c0_1 = arith.constant 0 : index
    %c0_2 = arith.constant 0 : index
    %2 = vector.load %arg2[%c0_1, %c0_2] : memref<16x128xbf16, #tpu.memory_space<vmem>>, vector<16x128xbf16>
    %cst = arith.constant dense<0.000000e+00> : vector<8x128xf32>
    %3 = tpu.matmul %1, %2, %cst {dimension_numbers = #tpu.dot_dimension_numbers<[1], [0], [0], [1], [0, 0, 1, 1], [], []>} : vector<8x16xbf16>, vector<16x128xbf16>, vector<8x128xf32> -> vector<8x128xf32>
    %c0_3 = arith.constant 0 : index
    %c0_4 = arith.constant 0 : index
    %4 = vector.load %arg4[%c0_3, %c0_4] : memref<1x128xf32, #tpu.memory_space<vmem>>, vector<1x128xf32>
    %5 = vector.broadcast %4 : vector<1x128xf32> to vector<8x128xf32>
    %6 = arith.addf %3, %5 : vector<8x128xf32>
    %7 = math.tanh %6 : vector<8x128xf32>
    %8 = arith.truncf %7 : vector<8x128xf32> to vector<8x128xbf16>
    %c0_5 = arith.constant 0 : index
    %c0_6 = arith.constant 0 : index
    %9 = vector.load %arg3[%c0_5, %c0_6] : memref<128x128xbf16, #tpu.memory_space<vmem>>, vector<128x128xbf16>
    %cst_7 = arith.constant dense<0.000000e+00> : vector<8x128xf32>
    %10 = tpu.matmul %8, %9, %cst_7 {dimension_numbers = #tpu.dot_dimension_numbers<[1], [0], [0], [1], [0, 0, 1, 1], [], []>} : vector<8x128xbf16>, vector<128x128xbf16>, vector<8x128xf32> -> vector<8x128xf32>
    %c0_8 = arith.constant 0 : index
    %c0_9 = arith.constant 0 : index
    %11 = vector.load %arg5[%c0_8, %c0_9] : memref<1x128xf32, #tpu.memory_space<vmem>>, vector<1x128xf32>
    %12 = vector.broadcast %11 : vector<1x128xf32> to vector<8x128xf32>
    %13 = arith.addf %10, %12 : vector<8x128xf32>
    %14 = math.tanh %13 : vector<8x128xf32>
    %c0_10 = arith.constant 0 : index
    %c0_11 = arith.constant 0 : index
    %15 = vector.load %arg6[%c0_10, %c0_11] : memref<8x128xf32, #tpu.memory_space<vmem>>, vector<8x128xf32>
    tpu.vector_store %arg6[%c0_10, %c0_11], %14 {strides = array<i32>} : memref<8x128xf32, #tpu.memory_space<vmem>>, vector<8x128xf32>,
    return
  }
  func.func @transform_0(%arg0: i32) -> (i32, i32) {
    %c0_i32 = arith.constant 0 : i32
    %c0_i32_0 = arith.constant 0 : i32
    return %arg0, %c0_i32 : i32, i32
  }
  func.func @transform_1(%arg0: i32) -> (i32, i32) {
    %c0_i32 = arith.constant 0 : i32
    %c0_i32_0 = arith.constant 0 : i32
    %c0_i32_1 = arith.constant 0 : i32
    return %c0_i32, %c0_i32_0 : i32, i32
  }
  func.func @transform_2(%arg0: i32) -> (i32, i32) {
    %c0_i32 = arith.constant 0 : i32
    %c0_i32_0 = arith.constant 0 : i32
    %c0_i32_1 = arith.constant 0 : i32
    return %c0_i32, %c0_i32_0 : i32, i32
  }
  func.func @transform_3(%arg0: i32) -> (i32, i32) {
    %c0_i32 = arith.constant 0 : i32
    %c0_i32_0 = arith.constant 0 : i32
    %c0_i32_1 = arith.constant 0 : i32
    return %c0_i32, %c0_i32_0 : i32, i32
  }
  func.func @transform_4(%arg0: i32) -> (i32, i32) {
    %c0_i32 = arith.constant 0 : i32
    %c0_i32_0 = arith.constant 0 : i32
    %c0_i32_1 = arith.constant 0 : i32
    return %c0_i32, %c0_i32_0 : i32, i32
  }
  func.func @transform_5(%arg0: i32) -> (i32, i32) {
    %c0_i32 = arith.constant 0 : i32
    %c0_i32_0 = arith.constant 0 : i32
    return %arg0, %c0_i32 : i32, i32
  }
}

module attributes {stable_mosaic.version = 11 : i64} {
  func.func @_fused_mlp_kernel(%arg0: i32, %arg1: memref<8x16xf32, #tpu.memory_space<vmem>>, %arg2: memref<16x128xbf16, #tpu.memory_space<vmem>>, %arg3: memref<128x128xbf16, #tpu.memory_space<vmem>>, %arg4: memref<1x128xf32, #tpu.memory_space<vmem>>, %arg5: memref<1x128xf32, #tpu.memory_space<vmem>>, %arg6: memref<8x128xf32, #tpu.memory_space<vmem>>) attributes {dimension_semantics = [#tpu.dimension_semantics<parallel>], iteration_bounds = array<i64: 1>, scalar_prefetch = 0 : i64, scratch_operands = 0 : i64, tpu.core_type = #tpu.core_type<tc>, window_params = [{transform_indices = @transform_0, window_bounds = array<i64: 8, 16>}, {pipeline_mode = #tpu.pipeline_mode<synchronous>, transform_indices = @transform_1, window_bounds = array<i64: 16, 128>}, {pipeline_mode = #tpu.pipeline_mode<synchronous>, transform_indices = @transform_2, window_bounds = array<i64: 128, 128>}, {pipeline_mode = #tpu.pipeline_mode<synchronous>, transform_indices = @transform_3, window_bounds = array<i64: 1, 128>}, {pipeline_mode = #tpu.pipeline_mode<synchronous>, transform_indices = @transform_4, window_bounds = array<i64: 1, 128>}, {transform_indices = @transform_5, window_bounds = array<i64: 8, 128>}]} {
    %c0 = arith.constant 0 : index
    %c0_0 = arith.constant 0 : index
    %0 = vector.load %arg1[%c0, %c0_0] : memref<8x16xf32, #tpu.memory_space<vmem>>, vector<8x16xf32>
    %1 = arith.truncf %0 : vector<8x16xf32> to vector<8x16xbf16>
    %c0_1 = arith.constant 0 : index
    %c0_2 = arith.constant 0 : index
    %2 = vector.load %arg2[%c0_1, %c0_2] : memref<16x128xbf16, #tpu.memory_space<vmem>>, vector<16x128xbf16>
    %cst = arith.constant dense<0.000000e+00> : vector<8x128xf32>
    %3 = tpu.matmul %1, %2, %cst {dimension_numbers = #tpu.dot_dimension_numbers<[1], [0], [0], [1], [0, 0, 1, 1], [], []>} : vector<8x16xbf16>, vector<16x128xbf16>, vector<8x128xf32> -> vector<8x128xf32>
    %c0_3 = arith.constant 0 : index
    %c0_4 = arith.constant 0 : index
    %4 = vector.load %arg4[%c0_3, %c0_4] : memref<1x128xf32, #tpu.memory_space<vmem>>, vector<1x128xf32>
    %5 = vector.broadcast %4 : vector<1x128xf32> to vector<8x128xf32>
    %6 = arith.addf %3, %5 : vector<8x128xf32>
    %7 = math.tanh %6 : vector<8x128xf32>
    %8 = arith.truncf %7 : vector<8x128xf32> to vector<8x128xbf16>
    %c0_5 = arith.constant 0 : index
    %c0_6 = arith.constant 0 : index
    %9 = vector.load %arg3[%c0_5, %c0_6] : memref<128x128xbf16, #tpu.memory_space<vmem>>, vector<128x128xbf16>
    %cst_7 = arith.constant dense<0.000000e+00> : vector<8x128xf32>
    %10 = tpu.matmul %8, %9, %cst_7 {dimension_numbers = #tpu.dot_dimension_numbers<[1], [0], [0], [1], [0, 0, 1, 1], [], []>} : vector<8x128xbf16>, vector<128x128xbf16>, vector<8x128xf32> -> vector<8x128xf32>
    %c0_8 = arith.constant 0 : index
    %c0_9 = arith.constant 0 : index
    %11 = vector.load %arg5[%c0_8, %c0_9] : memref<1x128xf32, #tpu.memory_space<vmem>>, vector<1x128xf32>
    %12 = vector.broadcast %11 : vector<1x128xf32> to vector<8x128xf32>
    %13 = arith.addf %10, %12 : vector<8x128xf32>
    %14 = math.tanh %13 : vector<8x128xf32>
    %c0_10 = arith.constant 0 : index
    %c0_11 = arith.constant 0 : index
    %15 = vector.load %arg6[%c0_10, %c0_11] : memref<8x128xf32, #tpu.memory_space<vmem>>, vector<8x128xf32>
    tpu.vector_store %arg6[%c0_10, %c0_11], %14 {strides = array<i32>} : memref<8x128xf32, #tpu.memory_space<vmem>>, vector<8x128xf32>,
    return
  }
  func.func @transform_0(%arg0: i32) -> (i32, i32) {
    %c0_i32 = arith.constant 0 : i32
    %c0_i32_0 = arith.constant 0 : i32
    return %arg0, %c0_i32 : i32, i32
  }
  func.func @transform_1(%arg0: i32) -> (i32, i32) {
    %c0_i32 = arith.constant 0 : i32
    %c0_i32_0 = arith.constant 0 : i32
    %c0_i32_1 = arith.constant 0 : i32
    return %c0_i32, %c0_i32_0 : i32, i32
  }
  func.func @transform_2(%arg0: i32) -> (i32, i32) {
    %c0_i32 = arith.constant 0 : i32
    %c0_i32_0 = arith.constant 0 : i32
    %c0_i32_1 = arith.constant 0 : i32
    return %c0_i32, %c0_i32_0 : i32, i32
  }
  func.func @transform_3(%arg0: i32) -> (i32, i32) {
    %c0_i32 = arith.constant 0 : i32
    %c0_i32_0 = arith.constant 0 : i32
    %c0_i32_1 = arith.constant 0 : i32
    return %c0_i32, %c0_i32_0 : i32, i32
  }
  func.func @transform_4(%arg0: i32) -> (i32, i32) {
    %c0_i32 = arith.constant 0 : i32
    %c0_i32_0 = arith.constant 0 : i32
    %c0_i32_1 = arith.constant 0 : i32
    return %c0_i32, %c0_i32_0 : i32, i32
  }
  func.func @transform_5(%arg0: i32) -> (i32, i32) {
    %c0_i32 = arith.constant 0 : i32
    %c0_i32_0 = arith.constant 0 : i32
    return %arg0, %c0_i32 : i32, i32
  }
}

</mosaic_0001>

<llo_original>
// kernel: tpu_custom_call.1
$region0: #{tpu_custom_call.1}
  #allocation0 [shape = 'u32[]', space=smem, size = 0x4, offset = 0x4, fixed_abs, tag = 'smem constant byte address 0x4 - core index']
  #allocation1 [shape = 'u32[144,128]{1,0:T(1,128)}', space=vmem, size = 0x12000, scoped, tag = 'internal scratch']
  %s0 = inlined_call_operand.hbm [shape: f32[8,16], index: 0, kind: input, shape index: {}]
  %s1 = inlined_call_operand.hbm [shape: bf16[16,128], index: 1, kind: input, shape index: {}]
  %s2 = inlined_call_operand.hbm [shape: bf16[128,128], index: 2, kind: input, shape index: {}]
  %s3 = inlined_call_operand.vmem [shape: f32[1,128], index: 3, kind: input, shape index: {}]
  %s4 = inlined_call_operand.vmem [shape: f32[1,128], index: 4, kind: input, shape index: {}]
  %s5 = inlined_call_operand.hbm [shape: f32[8,128], index: 5, kind: output, shape index: {}]
  %s6 = sld [smem:[#allocation0]]
  $region42: #{tpu_custom_call.1} parent=0
    _
  %s8 = ssub.s32 1, %s6
  %s9 = scalar_select 0, %s8, %s6
  $region1: #{tpu_custom_call.1} parent=0
    #allocation2 [shape = 'u8[4096]{0}', space=vmem, size = 0x1000, scoped, tag = 'input window, operand 0, single buffered']
    #allocation3 [shape = 's32[1]{0}', space=sflag, size = 0x4, scoped, tag = 'scoped memory for tpu_custom_call.1']
    #allocation4 [shape = 's32[1]{0}', space=sflag, size = 0x4, scoped, tag = 'scoped memory for tpu_custom_call.1']
    #allocation5 [shape = 'u8[4096]{0}', space=vmem, size = 0x1000, scoped, tag = 'input window, operand 1, single buffered']
    #allocation6 [shape = 's32[1]{0}', space=sflag, size = 0x4, scoped, tag = 'scoped memory for tpu_custom_call.1']
    #allocation7 [shape = 'u8[32768]{0}', space=vmem, size = 0x8000, scoped, tag = 'input window, operand 2, single buffered']
    #allocation8 [shape = 'u8[4096]{0}', space=vmem, size = 0x1000, scoped, tag = 'output window, operand 0, single buffered']
    %10 = vsyncpa [#allocation3], 0
    %11 = vsyncpa [#allocation6], 0
    %12 = vsyncpa [#allocation4], 0
    // Predicated region
    $region2: #{tpu_custom_call.1} parent=1 // pred_check
      _
    $region3: #{tpu_custom_call.1} parent=1 // pred_check_branch
      %14 = sbr.rel (0) target = $region5
    $region4: #{tpu_custom_call.1} parent=1 // pred_region
      %s16 = ssub.s32 128, 128
      %17 = vsyncadd [#allocation3], %s16
      %s19 = sshll.u32 [#allocation2], 4
      %s20 = int_to_ptr.vmem [resolvable:$true] %s19
      %22 = dma.hbm_to_vmem [thread:$0]  %s0, 128, %s20, [#allocation3]
    $region5: #{tpu_custom_call.1} parent=1 // pred_fallthru
      _
    // Predicated region
    $region6: #{tpu_custom_call.1} parent=1 // pred_check
      _
    $region7: #{tpu_custom_call.1} parent=1 // pred_check_branch
      %24 = sbr.rel (0) target = $region9
    $region8: #{tpu_custom_call.1} parent=1 // pred_region
      %s26 = ssub.s32 128, 128
      %27 = vsyncadd [#allocation6], %s26
      %s28 = sshll.u32 [#allocation5], 4
      %s29 = int_to_ptr.vmem [resolvable:$true] %s28
      %34 = dma.hbm_to_vmem [thread:$0]  %s1, 128, %s29, [#allocation6], 64, 64, 4
    $region9: #{tpu_custom_call.1} parent=1 // pred_fallthru
      _
    // Predicated region
    $region10: #{tpu_custom_call.1} parent=1 // pred_check
      _
    $region11: #{tpu_custom_call.1} parent=1 // pred_check_branch
      %36 = sbr.rel (0) target = $region13
    $region12: #{tpu_custom_call.1} parent=1 // pred_region
      %s38 = ssub.s32 1024, 1024
      %39 = vsyncadd [#allocation6], %s38
      %s40 = sshll.u32 [#allocation7], 4
      %s41 = int_to_ptr.vmem [resolvable:$true] %s40
      %46 = dma.hbm_to_vmem [thread:$0]  %s2, 1024, %s41, [#allocation6], 64, 64, 4
    $region13: #{tpu_custom_call.1} parent=1 // pred_fallthru
      _
    // Predicated region
    $region14: #{tpu_custom_call.1} parent=1 // pred_check
      _
    $region15: #{tpu_custom_call.1} parent=1 // pred_check_branch
      %48 = sbr.rel (0) target = $region17
    $region16: #{tpu_custom_call.1} parent=1 // pred_region
      _
    $region17: #{tpu_custom_call.1} parent=1 // pred_fallthru
      _
    // Predicated region
    $region18: #{tpu_custom_call.1} parent=1 // pred_check
      _
    $region19: #{tpu_custom_call.1} parent=1 // pred_check_branch
      %50 = sbr.rel (0) target = $region21
    $region20: #{tpu_custom_call.1} parent=1 // pred_region
      _
    $region21: #{tpu_custom_call.1} parent=1 // pred_fallthru
      _
    // Predicated region
    $region22: #{tpu_custom_call.1} parent=1 // pred_check
      _
    $region23: #{tpu_custom_call.1} parent=1 // pred_check_branch
      %52 = sbr.rel (0) target = $region25
    $region24: #{tpu_custom_call.1} parent=1 // pred_region
      %53 = dma.done [#allocation3], 128
    $region25: #{tpu_custom_call.1} parent=1 // pred_fallthru
      _
    // Predicated region
    $region26: #{tpu_custom_call.1} parent=1 // pred_check
      _
    $region27: #{tpu_custom_call.1} parent=1 // pred_check_branch
      %55 = sbr.rel (0) target = $region29
    $region28: #{tpu_custom_call.1} parent=1 // pred_region
      %56 = dma.done [#allocation6], 128
    $region29: #{tpu_custom_call.1} parent=1 // pred_fallthru
      _
    // Predicated region
    $region30: #{tpu_custom_call.1} parent=1 // pred_check
      _
    $region31: #{tpu_custom_call.1} parent=1 // pred_check_branch
      %58 = sbr.rel (0) target = $region33
    $region32: #{tpu_custom_call.1} parent=1 // pred_region
      %59 = dma.done [#allocation6], 1024
    $region33: #{tpu_custom_call.1} parent=1 // pred_fallthru
      _
    %v61 = vld [vmem:[#allocation2] sm:$0xff]
    %v62 = vpack.c.bf16 %v61, %v61
    %v63 = vld [vmem:[#allocation5] sm:$0xf]
    %v64 = vld [vmem:[#allocation5 + $0x4] sm:$0xf]
    %v65 = vld [vmem:[%s3] sm:$0x1]
    %v67 = vlaneseq
    %v68 = vshrl.u32 %v67, 7
    %v69 = vsub.s32 0, %v68
    %v70 = vrot.slane %v65, %v69
    %v74 = vunpack.c.l.b16 %v63
    %v75 = vunpack.c.l.b16 %v64
    %v76 = vpack.c.b16 %v75, %v74
    %vm78 = vcmask 130048
    %v80 = vsel %vm78, %v62, 0
    %82 = vmatprep.subr.bf16.mxu0 0
    %83 = vmatpush1.bf16.msra.mxu0 %v76
    %84 = vmatprep.subr.bf16.mxu0 0
    %85 = vmatpush1.bf16.msra.mxu0 0
    %86 = vmatprep.subr.bf16.mxu0 0
    %87 = vmatpush1.bf16.msra.mxu0 0
    %88 = vmatprep.subr.bf16.mxu0 0
    %89 = vmatpush1.bf16.msra.mxu0 0
    %90 = vmatprep.subr.bf16.mxu0 0
    %91 = vmatpush1.bf16.msra.mxu0 0
    %92 = vmatprep.subr.bf16.mxu0 0
    %93 = vmatpush1.bf16.msra.mxu0 0
    %94 = vmatprep.subr.bf16.mxu0 0
    %95 = vmatpush1.bf16.msra.mxu0 0
    %96 = vmatprep.subr.bf16.mxu0 0
    %97 = vmatpush1.bf16.msra.mxu0 0
    %98 = vmatprep.subr.bf16.mxu0 0
    %99 = vmatpush1.bf16.msra.mxu0 0
    %100 = vmatprep.subr.bf16.mxu0 0
    %101 = vmatpush1.bf16.msra.mxu0 0
    %102 = vmatprep.subr.bf16.mxu0 0
    %103 = vmatpush1.bf16.msra.mxu0 0
    %104 = vmatprep.subr.bf16.mxu0 0
    %105 = vmatpush1.bf16.msra.mxu0 0
    %106 = vmatprep.subr.bf16.mxu0 0
    %107 = vmatpush1.bf16.msra.mxu0 0
    %108 = vmatprep.subr.bf16.mxu0 0
    %109 = vmatpush1.bf16.msra.mxu0 0
    %110 = vmatprep.subr.bf16.mxu0 0
    %111 = vmatpush1.bf16.msra.mxu0 0
    %112 = vmatprep.subr.bf16.mxu0 0
    %113 = vmatpush1.bf16.msra.mxu0 0
    %114 = vmatprep.mubr.bf16.mxu0 0
    %115 = vmatmul.mubr.bf16.gmra.mrb[0].mxu0 %v80
    %v116 = vpop.f32.mrb[0].mxu0
    %v117 = vadd.f32 %v70, %v116
    %v118 = vpop.f32.mrb[0].mxu0
    %v119 = vpop.f32.mrb[0].mxu0
    %v120 = vpop.f32.mrb[0].mxu0
    %121 = vdwg.mxu0
    %v122 = vtanh.pop %v117
    %v123 = vpack.c.bf16 %v122, %v122
    %v124 = vld [vmem:[#allocation7] sm:$0xf]
    %v125 = vld [vmem:[#allocation7 + $0x4] sm:$0xf]
    %v126 = vld [vmem:[#allocation7 + $0x8] sm:$0xf]
    %v127 = vld [vmem:[#allocation7 + $0xc] sm:$0xf]
    %v128 = vld [vmem:[#allocation7 + $0x10] sm:$0xf]
    %v129 = vld [vmem:[#allocation7 + $0x14] sm:$0xf]
    %v130 = vld [vmem:[#allocation7 + $0x18] sm:$0xf]
    %v131 = vld [vmem:[#allocation7 + $0x1c] sm:$0xf]
    %v132 = vld [vmem:[#allocation7 + $0x20] sm:$0xf]
    %v133 = vld [vmem:[#allocation7 + $0x24] sm:$0xf]
    %v134 = vld [vmem:[#allocation7 + $0x28] sm:$0xf]
    %v135 = vld [vmem:[#allocation7 + $0x2c] sm:$0xf]
    %v136 = vld [vmem:[#allocation7 + $0x30] sm:$0xf]
    %v137 = vld [vmem:[#allocation7 + $0x34] sm:$0xf]
    %v138 = vld [vmem:[#allocation7 + $0x38] sm:$0xf]
    %v139 = vld [vmem:[#allocation7 + $0x3c] sm:$0xf]
    %v140 = vld [vmem:[%s4] sm:$0x1]
    %v142 = vlaneseq
    %v143 = vshrl.u32 %v142, 7
    %v144 = vsub.s32 0, %v143
    %v145 = vrot.slane %v140, %v144
    %v163 = vunpack.c.l.b16 %v124
    %v164 = vunpack.c.l.b16 %v125
    %v165 = vunpack.c.l.b16 %v126
    %v166 = vunpack.c.l.b16 %v127
    %v167 = vunpack.c.l.b16 %v128
    %v168 = vunpack.c.l.b16 %v129
    %v169 = vunpack.c.l.b16 %v130
    %v170 = vunpack.c.l.b16 %v131
    %v171 = vunpack.c.l.b16 %v132
    %v172 = vunpack.c.l.b16 %v133
    %v173 = vunpack.c.l.b16 %v134
    %v174 = vunpack.c.l.b16 %v135
    %v175 = vunpack.c.l.b16 %v136
    %v176 = vunpack.c.l.b16 %v137
    %v177 = vunpack.c.l.b16 %v138
    %v178 = vunpack.c.l.b16 %v139
    %v179 = vpack.c.b16 %v164, %v163
    %v180 = vpack.c.b16 %v166, %v165
    %v181 = vpack.c.b16 %v168, %v167
    %v182 = vpack.c.b16 %v170, %v169
    %v183 = vpack.c.b16 %v172, %v171
    %v184 = vpack.c.b16 %v174, %v173
    %v185 = vpack.c.b16 %v176, %v175
    %v186 = vpack.c.b16 %v178, %v177
    %195 = vmatprep.subr.bf16.mxu0 0
    %196 = vmatpush1.bf16.msra.mxu0 %v179
    %197 = vmatprep.subr.bf16.mxu0 0
    %198 = vmatpush1.bf16.msra.mxu0 %v180
    %199 = vmatprep.subr.bf16.mxu0 0
    %200 = vmatpush1.bf16.msra.mxu0 %v181
    %201 = vmatprep.subr.bf16.mxu0 0
    %202 = vmatpush1.bf16.msra.mxu0 %v182
    %203 = vmatprep.subr.bf16.mxu0 0
    %204 = vmatpush1.bf16.msra.mxu0 %v183
    %205 = vmatprep.subr.bf16.mxu0 0
    %206 = vmatpush1.bf16.msra.mxu0 %v184
    %207 = vmatprep.subr.bf16.mxu0 0
    %208 = vmatpush1.bf16.msra.mxu0 %v185
    %209 = vmatprep.subr.bf16.mxu0 0
    %210 = vmatpush1.bf16.msra.mxu0 %v186
    %211 = vmatprep.subr.bf16.mxu0 0
    %212 = vmatpush1.bf16.msra.mxu0 0
    %213 = vmatprep.subr.bf16.mxu0 0
    %214 = vmatpush1.bf16.msra.mxu0 0
    %215 = vmatprep.subr.bf16.mxu0 0
    %216 = vmatpush1.bf16.msra.mxu0 0
    %217 = vmatprep.subr.bf16.mxu0 0
    %218 = vmatpush1.bf16.msra.mxu0 0
    %219 = vmatprep.subr.bf16.mxu0 0
    %220 = vmatpush1.bf16.msra.mxu0 0
    %221 = vmatprep.subr.bf16.mxu0 0
    %222 = vmatpush1.bf16.msra.mxu0 0
    %223 = vmatprep.subr.bf16.mxu0 0
    %224 = vmatpush1.bf16.msra.mxu0 0
    %225 = vmatprep.subr.bf16.mxu0 0
    %226 = vmatpush1.bf16.msra.mxu0 0
    %227 = vmatprep.mubr.bf16.mxu0 0
    %228 = vmatmul.mubr.bf16.gmra.mrb[0].mxu0 %v123
    %v229 = vpop.f32.mrb[0].mxu0
    %v230 = vadd.f32 %v145, %v229
    %v231 = vpop.f32.mrb[0].mxu0
    %v232 = vpop.f32.mrb[0].mxu0
    %v233 = vpop.f32.mrb[0].mxu0
    %234 = vdwg.mxu0
    %v235 = vtanh.pop %v230
    %236 = vst [vmem:[#allocation8] sm:$0xff] %v235
    // Predicated region
    $region34: #{tpu_custom_call.1} parent=1 // pred_check
      _
    $region35: #{tpu_custom_call.1} parent=1 // pred_check_branch
      %238 = sbr.rel (0) target = $region37
    $region36: #{tpu_custom_call.1} parent=1 // pred_region
      %s240 = ssub.s32 128, 128
      %241 = vsyncadd [#allocation4], %s240
      %s243 = sshll.u32 [#allocation8], 4
      %s244 = int_to_ptr.vmem [resolvable:$true] %s243
      %246 = dma.vmem_to_hbm [thread:$0]  %s244, 128, %s5, [#allocation4]
    $region37: #{tpu_custom_call.1} parent=1 // pred_fallthru
      _
    // Predicated region
    $region38: #{tpu_custom_call.1} parent=1 // pred_check
      _
    $region39: #{tpu_custom_call.1} parent=1 // pred_check_branch
      %248 = sbr.rel (0) target = $region41
    $region40: #{tpu_custom_call.1} parent=1 // pred_region
      %249 = dma.done [#allocation4], 128
    $region41: #{tpu_custom_call.1} parent=1 // pred_fallthru
      _
    %250 = vsyncpa [#allocation3], 1
    %251 = vsyncpa [#allocation6], 1
    %252 = vsyncpa [#allocation4], 1

// kernel: tpu_custom_call.1
$region0: #{tpu_custom_call.1}
  #allocation0 [shape = 'u32[]', space=smem, size = 0x4, offset = 0x4, fixed_abs, tag = 'smem constant byte address 0x4 - core index']
  #allocation1 [shape = 'u32[144,128]{1,0:T(1,128)}', space=vmem, size = 0x12000, scoped, tag = 'internal scratch']
  %s0 = inlined_call_operand.hbm [shape: f32[8,16], index: 0, kind: input, shape index: {}]
  %s1 = inlined_call_operand.hbm [shape: bf16[16,128], index: 1, kind: input, shape index: {}]
  %s2 = inlined_call_operand.hbm [shape: bf16[128,128], index: 2, kind: input, shape index: {}]
  %s3 = inlined_call_operand.vmem [shape: f32[1,128], index: 3, kind: input, shape index: {}]
  %s4 = inlined_call_operand.vmem [shape: f32[1,128], index: 4, kind: input, shape index: {}]
  %s5 = inlined_call_operand.hbm [shape: f32[8,128], index: 5, kind: output, shape index: {}]
  %s6 = sld [smem:[#allocation0]]
  $region42: #{tpu_custom_call.1} parent=0
    _
  %s8 = ssub.s32 1, %s6
  %s9 = scalar_select 0, %s8, %s6
  $region1: #{tpu_custom_call.1} parent=0
    #allocation2 [shape = 'u8[4096]{0}', space=vmem, size = 0x1000, scoped, tag = 'input window, operand 0, single buffered']
    #allocation3 [shape = 's32[1]{0}', space=sflag, size = 0x4, scoped, tag = 'scoped memory for tpu_custom_call.1']
    #allocation4 [shape = 's32[1]{0}', space=sflag, size = 0x4, scoped, tag = 'scoped memory for tpu_custom_call.1']
    #allocation5 [shape = 'u8[4096]{0}', space=vmem, size = 0x1000, scoped, tag = 'input window, operand 1, single buffered']
    #allocation6 [shape = 's32[1]{0}', space=sflag, size = 0x4, scoped, tag = 'scoped memory for tpu_custom_call.1']
    #allocation7 [shape = 'u8[32768]{0}', space=vmem, size = 0x8000, scoped, tag = 'input window, operand 2, single buffered']
    #allocation8 [shape = 'u8[4096]{0}', space=vmem, size = 0x1000, scoped, tag = 'output window, operand 0, single buffered']
    %10 = vsyncpa [#allocation3], 0
    %11 = vsyncpa [#allocation6], 0
    %12 = vsyncpa [#allocation4], 0
    // Predicated region
    $region2: #{tpu_custom_call.1} parent=1 // pred_check
      _
    $region3: #{tpu_custom_call.1} parent=1 // pred_check_branch
      %14 = sbr.rel (0) target = $region5
    $region4: #{tpu_custom_call.1} parent=1 // pred_region
      %s16 = ssub.s32 128, 128
      %17 = vsyncadd [#allocation3], %s16
      %s19 = sshll.u32 [#allocation2], 4
      %s20 = int_to_ptr.vmem [resolvable:$true] %s19
      %22 = dma.hbm_to_vmem [thread:$0]  %s0, 128, %s20, [#allocation3]
    $region5: #{tpu_custom_call.1} parent=1 // pred_fallthru
      _
    // Predicated region
    $region6: #{tpu_custom_call.1} parent=1 // pred_check
      _
    $region7: #{tpu_custom_call.1} parent=1 // pred_check_branch
      %24 = sbr.rel (0) target = $region9
    $region8: #{tpu_custom_call.1} parent=1 // pred_region
      %s26 = ssub.s32 128, 128
      %27 = vsyncadd [#allocation6], %s26
      %s28 = sshll.u32 [#allocation5], 4
      %s29 = int_to_ptr.vmem [resolvable:$true] %s28
      %34 = dma.hbm_to_vmem [thread:$0]  %s1, 128, %s29, [#allocation6], 64, 64, 4
    $region9: #{tpu_custom_call.1} parent=1 // pred_fallthru
      _
    // Predicated region
    $region10: #{tpu_custom_call.1} parent=1 // pred_check
      _
    $region11: #{tpu_custom_call.1} parent=1 // pred_check_branch
      %36 = sbr.rel (0) target = $region13
    $region12: #{tpu_custom_call.1} parent=1 // pred_region
      %s38 = ssub.s32 1024, 1024
      %39 = vsyncadd [#allocation6], %s38
      %s40 = sshll.u32 [#allocation7], 4
      %s41 = int_to_ptr.vmem [resolvable:$true] %s40
      %46 = dma.hbm_to_vmem [thread:$0]  %s2, 1024, %s41, [#allocation6], 64, 64, 4
    $region13: #{tpu_custom_call.1} parent=1 // pred_fallthru
      _
    // Predicated region
    $region14: #{tpu_custom_call.1} parent=1 // pred_check
      _
    $region15: #{tpu_custom_call.1} parent=1 // pred_check_branch
      %48 = sbr.rel (0) target = $region17
    $region16: #{tpu_custom_call.1} parent=1 // pred_region
      _
    $region17: #{tpu_custom_call.1} parent=1 // pred_fallthru
      _
    // Predicated region
    $region18: #{tpu_custom_call.1} parent=1 // pred_check
      _
    $region19: #{tpu_custom_call.1} parent=1 // pred_check_branch
      %50 = sbr.rel (0) target = $region21
    $region20: #{tpu_custom_call.1} parent=1 // pred_region
      _
    $region21: #{tpu_custom_call.1} parent=1 // pred_fallthru
      _
    // Predicated region
    $region22: #{tpu_custom_call.1} parent=1 // pred_check
      _
    $region23: #{tpu_custom_call.1} parent=1 // pred_check_branch
      %52 = sbr.rel (0) target = $region25
    $region24: #{tpu_custom_call.1} parent=1 // pred_region
      %53 = dma.done [#allocation3], 128
    $region25: #{tpu_custom_call.1} parent=1 // pred_fallthru
      _
    // Predicated region
    $region26: #{tpu_custom_call.1} parent=1 // pred_check
      _
    $region27: #{tpu_custom_call.1} parent=1 // pred_check_branch
      %55 = sbr.rel (0) target = $region29
    $region28: #{tpu_custom_call.1} parent=1 // pred_region
      %56 = dma.done [#allocation6], 128
    $region29: #{tpu_custom_call.1} parent=1 // pred_fallthru
      _
    // Predicated region
    $region30: #{tpu_custom_call.1} parent=1 // pred_check
      _
    $region31: #{tpu_custom_call.1} parent=1 // pred_check_branch
      %58 = sbr.rel (0) target = $region33
    $region32: #{tpu_custom_call.1} parent=1 // pred_region
      %59 = dma.done [#allocation6], 1024
    $region33: #{tpu_custom_call.1} parent=1 // pred_fallthru
      _
    %v61 = vld [vmem:[#allocation2] sm:$0xff]
    %v62 = vpack.c.bf16 %v61, %v61
    %v63 = vld [vmem:[#allocation5] sm:$0xf]
    %v64 = vld [vmem:[#allocation5 + $0x4] sm:$0xf]
    %v65 = vld [vmem:[%s3] sm:$0x1]
    %v67 = vlaneseq
    %v68 = vshrl.u32 %v67, 7
    %v69 = vsub.s32 0, %v68
    %v70 = vrot.slane %v65, %v69
    %v74 = vunpack.c.l.b16 %v63
    %v75 = vunpack.c.l.b16 %v64
    %v76 = vpack.c.b16 %v75, %v74
    %vm78 = vcmask 130048
    %v80 = vsel %vm78, %v62, 0
    %82 = vmatprep.subr.bf16.mxu0 0
    %83 = vmatpush1.bf16.msra.mxu0 %v76
    %84 = vmatprep.subr.bf16.mxu0 0
    %85 = vmatpush1.bf16.msra.mxu0 0
    %86 = vmatprep.subr.bf16.mxu0 0
    %87 = vmatpush1.bf16.msra.mxu0 0
    %88 = vmatprep.subr.bf16.mxu0 0
    %89 = vmatpush1.bf16.msra.mxu0 0
    %90 = vmatprep.subr.bf16.mxu0 0
    %91 = vmatpush1.bf16.msra.mxu0 0
    %92 = vmatprep.subr.bf16.mxu0 0
    %93 = vmatpush1.bf16.msra.mxu0 0
    %94 = vmatprep.subr.bf16.mxu0 0
    %95 = vmatpush1.bf16.msra.mxu0 0
    %96 = vmatprep.subr.bf16.mxu0 0
    %97 = vmatpush1.bf16.msra.mxu0 0
    %98 = vmatprep.subr.bf16.mxu0 0
    %99 = vmatpush1.bf16.msra.mxu0 0
    %100 = vmatprep.subr.bf16.mxu0 0
    %101 = vmatpush1.bf16.msra.mxu0 0
    %102 = vmatprep.subr.bf16.mxu0 0
    %103 = vmatpush1.bf16.msra.mxu0 0
    %104 = vmatprep.subr.bf16.mxu0 0
    %105 = vmatpush1.bf16.msra.mxu0 0
    %106 = vmatprep.subr.bf16.mxu0 0
    %107 = vmatpush1.bf16.msra.mxu0 0
    %108 = vmatprep.subr.bf16.mxu0 0
    %109 = vmatpush1.bf16.msra.mxu0 0
    %110 = vmatprep.subr.bf16.mxu0 0
    %111 = vmatpush1.bf16.msra.mxu0 0
    %112 = vmatprep.subr.bf16.mxu0 0
    %113 = vmatpush1.bf16.msra.mxu0 0
    %114 = vmatprep.mubr.bf16.mxu0 0
    %115 = vmatmul.mubr.bf16.gmra.mrb[0].mxu0 %v80
    %v116 = vpop.f32.mrb[0].mxu0
    %v117 = vadd.f32 %v70, %v116
    %v118 = vpop.f32.mrb[0].mxu0
    %v119 = vpop.f32.mrb[0].mxu0
    %v120 = vpop.f32.mrb[0].mxu0
    %121 = vdwg.mxu0
    %v122 = vtanh.pop %v117
    %v123 = vpack.c.bf16 %v122, %v122
    %v124 = vld [vmem:[#allocation7] sm:$0xf]
    %v125 = vld [vmem:[#allocation7 + $0x4] sm:$0xf]
    %v126 = vld [vmem:[#allocation7 + $0x8] sm:$0xf]
    %v127 = vld [vmem:[#allocation7 + $0xc] sm:$0xf]
    %v128 = vld [vmem:[#allocation7 + $0x10] sm:$0xf]
    %v129 = vld [vmem:[#allocation7 + $0x14] sm:$0xf]
    %v130 = vld [vmem:[#allocation7 + $0x18] sm:$0xf]
    %v131 = vld [vmem:[#allocation7 + $0x1c] sm:$0xf]
    %v132 = vld [vmem:[#allocation7 + $0x20] sm:$0xf]
    %v133 = vld [vmem:[#allocation7 + $0x24] sm:$0xf]
    %v134 = vld [vmem:[#allocation7 + $0x28] sm:$0xf]
    %v135 = vld [vmem:[#allocation7 + $0x2c] sm:$0xf]
    %v136 = vld [vmem:[#allocation7 + $0x30] sm:$0xf]
    %v137 = vld [vmem:[#allocation7 + $0x34] sm:$0xf]
    %v138 = vld [vmem:[#allocation7 + $0x38] sm:$0xf]
    %v139 = vld [vmem:[#allocation7 + $0x3c] sm:$0xf]
    %v140 = vld [vmem:[%s4] sm:$0x1]
    %v142 = vlaneseq
    %v143 = vshrl.u32 %v142, 7
    %v144 = vsub.s32 0, %v143
    %v145 = vrot.slane %v140, %v144
    %v163 = vunpack.c.l.b16 %v124
    %v164 = vunpack.c.l.b16 %v125
    %v165 = vunpack.c.l.b16 %v126
    %v166 = vunpack.c.l.b16 %v127
    %v167 = vunpack.c.l.b16 %v128
    %v168 = vunpack.c.l.b16 %v129
    %v169 = vunpack.c.l.b16 %v130
    %v170 = vunpack.c.l.b16 %v131
    %v171 = vunpack.c.l.b16 %v132
    %v172 = vunpack.c.l.b16 %v133
    %v173 = vunpack.c.l.b16 %v134
    %v174 = vunpack.c.l.b16 %v135
    %v175 = vunpack.c.l.b16 %v136
    %v176 = vunpack.c.l.b16 %v137
    %v177 = vunpack.c.l.b16 %v138
    %v178 = vunpack.c.l.b16 %v139
    %v179 = vpack.c.b16 %v164, %v163
    %v180 = vpack.c.b16 %v166, %v165
    %v181 = vpack.c.b16 %v168, %v167
    %v182 = vpack.c.b16 %v170, %v169
    %v183 = vpack.c.b16 %v172, %v171
    %v184 = vpack.c.b16 %v174, %v173
    %v185 = vpack.c.b16 %v176, %v175
    %v186 = vpack.c.b16 %v178, %v177
    %195 = vmatprep.subr.bf16.mxu0 0
    %196 = vmatpush1.bf16.msra.mxu0 %v179
    %197 = vmatprep.subr.bf16.mxu0 0
    %198 = vmatpush1.bf16.msra.mxu0 %v180
    %199 = vmatprep.subr.bf16.mxu0 0
    %200 = vmatpush1.bf16.msra.mxu0 %v181
    %201 = vmatprep.subr.bf16.mxu0 0
    %202 = vmatpush1.bf16.msra.mxu0 %v182
    %203 = vmatprep.subr.bf16.mxu0 0
    %204 = vmatpush1.bf16.msra.mxu0 %v183
    %205 = vmatprep.subr.bf16.mxu0 0
    %206 = vmatpush1.bf16.msra.mxu0 %v184
    %207 = vmatprep.subr.bf16.mxu0 0
    %208 = vmatpush1.bf16.msra.mxu0 %v185
    %209 = vmatprep.subr.bf16.mxu0 0
    %210 = vmatpush1.bf16.msra.mxu0 %v186
    %211 = vmatprep.subr.bf16.mxu0 0
    %212 = vmatpush1.bf16.msra.mxu0 0
    %213 = vmatprep.subr.bf16.mxu0 0
    %214 = vmatpush1.bf16.msra.mxu0 0
    %215 = vmatprep.subr.bf16.mxu0 0
    %216 = vmatpush1.bf16.msra.mxu0 0
    %217 = vmatprep.subr.bf16.mxu0 0
    %218 = vmatpush1.bf16.msra.mxu0 0
    %219 = vmatprep.subr.bf16.mxu0 0
    %220 = vmatpush1.bf16.msra.mxu0 0
    %221 = vmatprep.subr.bf16.mxu0 0
    %222 = vmatpush1.bf16.msra.mxu0 0
    %223 = vmatprep.subr.bf16.mxu0 0
    %224 = vmatpush1.bf16.msra.mxu0 0
    %225 = vmatprep.subr.bf16.mxu0 0
    %226 = vmatpush1.bf16.msra.mxu0 0
    %227 = vmatprep.mubr.bf16.mxu0 0
    %228 = vmatmul.mubr.bf16.gmra.mrb[0].mxu0 %v123
    %v229 = vpop.f32.mrb[0].mxu0
    %v230 = vadd.f32 %v145, %v229
    %v231 = vpop.f32.mrb[0].mxu0
    %v232 = vpop.f32.mrb[0].mxu0
    %v233 = vpop.f32.mrb[0].mxu0
    %234 = vdwg.mxu0
    %v235 = vtanh.pop %v230
    %236 = vst [vmem:[#allocation8] sm:$0xff] %v235
    // Predicated region
    $region34: #{tpu_custom_call.1} parent=1 // pred_check
      _
    $region35: #{tpu_custom_call.1} parent=1 // pred_check_branch
      %238 = sbr.rel (0) target = $region37
    $region36: #{tpu_custom_call.1} parent=1 // pred_region
      %s240 = ssub.s32 128, 128
      %241 = vsyncadd [#allocation4], %s240
      %s243 = sshll.u32 [#allocation8], 4
      %s244 = int_to_ptr.vmem [resolvable:$true] %s243
      %246 = dma.vmem_to_hbm [thread:$0]  %s244, 128, %s5, [#allocation4]
    $region37: #{tpu_custom_call.1} parent=1 // pred_fallthru
      _
    // Predicated region
    $region38: #{tpu_custom_call.1} parent=1 // pred_check
      _
    $region39: #{tpu_custom_call.1} parent=1 // pred_check_branch
      %248 = sbr.rel (0) target = $region41
    $region40: #{tpu_custom_call.1} parent=1 // pred_region
      %249 = dma.done [#allocation4], 128
    $region41: #{tpu_custom_call.1} parent=1 // pred_fallthru
      _
    %250 = vsyncpa [#allocation3], 1
    %251 = vsyncpa [#allocation6], 1
    %252 = vsyncpa [#allocation4], 1

</llo_original>
